<compile_context>
chip_gen: v7x
topology: tpu7x:2x2x1
jax: 0.10.0
libtpu: 0.0.40
codegen_flags: <defaults>
</compile_context>

<pallas_src>
import functools

import jax
import jax.numpy as jnp
import numpy as np
from jax.experimental import pallas as pl
from jax.experimental.pallas import tpu as pltpu


def _make_kernel(bt, c_in, c_out, k, l_out, l_pool, pool):
    def kernel(x_ref, w_ref, scale_ref, shift_ref, o_ref, xcol_ref, y_ref):
        # x_ref:     (Bt, L, C_in)       bf16  input block (length-major layout)
        # w_ref:     (C_in*K, C_out)     bf16  im2col-flattened conv weight (row = kk*C_in + ci)
        # scale_ref: (1, C_out)          f32   folded BN scale
        # shift_ref: (1, C_out)          f32   folded BN shift (includes conv bias)
        # o_ref:     (Bt, L_pool, C_out) f32   pooled output block
        # xcol_ref:  (Bt*L_out, C_in*K)  bf16  im2col scratch
        # y_ref:     (Bt*L_out, C_out)   f32   conv+BN+ReLU scratch (pooled via strided reads)

        # im2col: for every sample, lay K shifted (L_out, C_in) windows side by side on lanes.
        for b in range(bt):
            xb = x_ref[b]                                      # (L, C_in)
            for kk in range(k):
                xcol_ref[pl.ds(b * l_out, l_out), pl.ds(kk * c_in, c_in)] = xb[kk:kk + l_out, :]

        # Single MXU matmul: (Bt*L_out, C_in*K) @ (C_in*K, C_out), bf16 in / f32 accumulate.
        y = jnp.dot(xcol_ref[...], w_ref[...], preferred_element_type=jnp.float32)

        # Folded BatchNorm (+ conv bias) and ReLU on the VPU, in f32.
        y_ref[...] = jnp.maximum(y * scale_ref[...] + shift_ref[...], 0.0)

        # MaxPool1d(pool): stride-`pool` sublane reads from scratch + elementwise max (no MXU).
        for b in range(bt):
            base = b * l_out
            pooled = y_ref[pl.ds(base, l_pool, stride=pool), :]
            for j in range(1, pool):
                pooled = jnp.maximum(pooled, y_ref[pl.ds(base + j, l_pool, stride=pool), :])
            o_ref[b] = pooled.astype(o_ref.dtype)

    return kernel


def _pick_batch_tile(B, c_in, c_out, k, L, l_out, l_pool, budget_bytes=6 * 1024 * 1024):
    """Largest Bt dividing B that fits the VMEM budget; keep >=2 grid steps when B allows."""
    best = 1
    for bt in range(1, B + 1):
        if B % bt:
            continue
        if B >= 2 and B // bt < 2:
            continue  # keep >= 2 grid steps so both v7x TensorCores get work
        x_bytes = bt * L * c_in * 2              # bf16 input block
        o_bytes = bt * l_pool * c_out * 4        # f32 output block
        xcol_bytes = bt * l_out * c_in * k * 2   # bf16 im2col scratch
        y_bytes = bt * l_out * c_out * 4         # f32 conv/relu scratch
        if 2 * (x_bytes + o_bytes) + xcol_bytes + y_bytes <= budget_bytes:
            best = bt
    return best


def cnn_block_forward(x, w, b, gamma, beta, run_mean, run_var,
                      *, kernel_size, pool_size=2, eps=1e-5, batch_tile=None):
    """x: (B, C_in, L) f32; w: (C_out, C_in, K); b/gamma/beta/run_mean/run_var: (C_out,).

    Returns (B, C_out, L_pool) with L_pool = (L - K + 1) // pool_size (PyTorch NCL layout)."""
    B, C_in, L = x.shape
    C_out = w.shape[0]
    K = kernel_size
    L_out = L - K + 1
    L_pool = L_out // pool_size
    assert L_pool >= 1

    Bt = batch_tile if batch_tile is not None else _pick_batch_tile(
        B, C_in, C_out, K, L, L_out, L_pool)
    assert B % Bt == 0

    # Fold conv bias + eval-mode BatchNorm affine into one per-channel scale/shift.
    scale = gamma / jnp.sqrt(run_var + eps)
    shift = beta + (b - run_mean) * scale
    scale2 = scale.reshape(1, C_out).astype(jnp.float32)
    shift2 = shift.reshape(1, C_out).astype(jnp.float32)

    # Length-major activations and im2col-flattened weights, cast to bf16 for the MXU.
    x_t = jnp.transpose(x, (0, 2, 1)).astype(jnp.bfloat16)                          # (B, L, C_in)
    w2 = jnp.transpose(w, (2, 1, 0)).reshape(K * C_in, C_out).astype(jnp.bfloat16)  # row=kk*C_in+ci

    kernel = _make_kernel(Bt, C_in, C_out, K, L_out, L_pool, pool_size)

    out = pl.pallas_call(
        kernel,
        out_shape=jax.ShapeDtypeStruct((B, L_pool, C_out), jnp.float32),
        grid=(B // Bt,),
        in_specs=[
            pl.BlockSpec((Bt, L, C_in), lambda bi: (bi, 0, 0)),
            pl.BlockSpec((K * C_in, C_out), lambda bi: (0, 0)),
            pl.BlockSpec((1, C_out), lambda bi: (0, 0)),
            pl.BlockSpec((1, C_out), lambda bi: (0, 0)),
        ],
        out_specs=pl.BlockSpec((Bt, L_pool, C_out), lambda bi: (bi, 0, 0)),
        scratch_shapes=[
            pltpu.VMEM((Bt * L_out, C_in * K), jnp.bfloat16),
            pltpu.VMEM((Bt * L_out, C_out), jnp.float32),
        ],
        compiler_params=pltpu.CompilerParams(
            dimension_semantics=("parallel",),
            vmem_limit_bytes=32 * 1024 * 1024,
        ),
        cost_estimate=pl.CostEstimate(
            flops=2 * B * L_out * C_in * K * C_out,
            transcendentals=0,
            bytes_accessed=x_t.size * 2 + w2.size * 2 + B * L_pool * C_out * 4,
        ),
    )(x_t, w2, scale2, shift2)

    # Back to PyTorch's (B, C_out, L_pool) layout (wrapper-side layout plumbing only).
    return jnp.transpose(out, (0, 2, 1))


def _reference(x, w, b, gamma, beta, run_mean, run_var,
               *, kernel_size, pool_size=2, eps=1e-5, matmul_dtype=jnp.float32):
    """Pure-JAX eval-mode CNNBlock reference; matmul_dtype=bfloat16 matches the kernel's MXU inputs."""
    B, C_in, L = x.shape
    C_out, _, K = w.shape
    L_out = L - K + 1
    xq = x.astype(matmul_dtype).astype(jnp.float32)
    wq = w.astype(matmul_dtype).astype(jnp.float32)
    y = jnp.zeros((B, C_out, L_out), jnp.float32)
    for kk in range(K):
        y = y + jnp.einsum("oc,bcl->bol", wq[:, :, kk], xq[:, :, kk:kk + L_out])
    y = y + b[None, :, None]
    y = (y - run_mean[None, :, None]) / jnp.sqrt(run_var[None, :, None] + eps)
    y = y * gamma[None, :, None] + beta[None, :, None]
    y = jnp.maximum(y, 0.0)
    L_pool = L_out // pool_size
    y = y[:, :, :L_pool * pool_size].reshape(B, C_out, L_pool, pool_size).max(axis=-1)
    return y  # dropout is identity in eval mode


if __name__ == "__main__":
    B, C_in, C_out, L, K, POOL = 4, 4, 8, 16, 3, 2

    key = jax.random.PRNGKey(0)
    kx, kw, kb = jax.random.split(key, 3)

    x = jax.random.normal(kx, (B, C_in, L), dtype=jnp.float32)

    # Conv1d weight: kaiming_normal_(mode='fan_out', nonlinearity='relu') -> std = sqrt(2/(C_out*K))
    fan_out = C_out * K
    w = jax.random.normal(kw, (C_out, C_in, K), dtype=jnp.float32) * jnp.sqrt(2.0 / fan_out)
    # Conv1d bias: default uniform(-1/sqrt(fan_in), 1/sqrt(fan_in)), fan_in = C_in*K
    bound = 1.0 / np.sqrt(C_in * K)
    b = jax.random.uniform(kb, (C_out,), minval=-bound, maxval=bound, dtype=jnp.float32)

    # BatchNorm1d defaults (freshly initialized, eval mode)
    gamma = jnp.ones((C_out,), jnp.float32)
    beta = jnp.zeros((C_out,), jnp.float32)
    run_mean = jnp.zeros((C_out,), jnp.float32)
    run_var = jnp.ones((C_out,), jnp.float32)

    fwd = functools.partial(cnn_block_forward, kernel_size=K, pool_size=POOL)
    out = jax.block_until_ready(fwd(x, w, b, gamma, beta, run_mean, run_var))
    assert out.shape == (B, C_out, (L - K + 1) // POOL)

    # Tight check vs. a reference that matches the kernel's bf16 MXU inputs (f32 accumulate).
    ref_bf16 = _reference(x, w, b, gamma, beta, run_mean, run_var,
                          kernel_size=K, pool_size=POOL, matmul_dtype=jnp.bfloat16)
    np.testing.assert_allclose(np.asarray(out), np.asarray(ref_bf16), rtol=1e-4, atol=1e-4)

    # Looser check vs. the full-f32 reference (bounds the bf16 quantization error).
    ref_f32 = _reference(x, w, b, gamma, beta, run_mean, run_var,
                         kernel_size=K, pool_size=POOL, matmul_dtype=jnp.float32)
    np.testing.assert_allclose(np.asarray(out), np.asarray(ref_f32), rtol=2e-2, atol=2e-2)

    print("KERNEL_OK")
</pallas_src>

<mosaic_0001>
module attributes {stable_mosaic.version = 11 : i64} {
  func.func @kernel(%arg0: i32, %arg1: memref<2x16x4xbf16, #tpu.memory_space<vmem>>, %arg2: memref<12x8xbf16, #tpu.memory_space<vmem>>, %arg3: memref<1x8xf32, #tpu.memory_space<vmem>>, %arg4: memref<1x8xf32, #tpu.memory_space<vmem>>, %arg5: memref<2x7x8xf32, #tpu.memory_space<vmem>>, %arg6: memref<28x12xbf16, #tpu.memory_space<vmem>>, %arg7: memref<28x8xf32, #tpu.memory_space<vmem>>) attributes {dimension_semantics = [#tpu.dimension_semantics<parallel>], iteration_bounds = array<i64: 2>, scalar_prefetch = 0 : i64, scratch_operands = 2 : i64, tpu.core_type = #tpu.core_type<tc>, window_params = [{transform_indices = @transform_0, window_bounds = array<i64: 2, 16, 4>}, {pipeline_mode = #tpu.pipeline_mode<synchronous>, transform_indices = @transform_1, window_bounds = array<i64: 12, 8>}, {pipeline_mode = #tpu.pipeline_mode<synchronous>, transform_indices = @transform_2, window_bounds = array<i64: 1, 8>}, {pipeline_mode = #tpu.pipeline_mode<synchronous>, transform_indices = @transform_3, window_bounds = array<i64: 1, 8>}, {transform_indices = @transform_4, window_bounds = array<i64: 2, 7, 8>}]} {
    %c0 = arith.constant 0 : index
    %c0_0 = arith.constant 0 : index
    %c0_1 = arith.constant 0 : index
    %0 = vector.load %arg1[%c0, %c0_0, %c0_1] : memref<2x16x4xbf16, #tpu.memory_space<vmem>>, vector<1x16x4xbf16>
    %1 = vector.shape_cast %0 : vector<1x16x4xbf16> to vector<16x4xbf16>
    %2 = vector.extract_strided_slice %1 {offsets = [0, 0], sizes = [14, 4], strides = [1, 1]} : vector<16x4xbf16> to vector<14x4xbf16>
    %c0_2 = arith.constant 0 : index
    %c0_3 = arith.constant 0 : index
    %3 = vector.load %arg6[%c0_2, %c0_3] : memref<28x12xbf16, #tpu.memory_space<vmem>>, vector<14x4xbf16>
    tpu.vector_store %arg6[%c0_2, %c0_3], %2 {strides = array<i32>} : memref<28x12xbf16, #tpu.memory_space<vmem>>, vector<14x4xbf16>,
    %4 = vector.extract_strided_slice %1 {offsets = [1, 0], sizes = [14, 4], strides = [1, 1]} : vector<16x4xbf16> to vector<14x4xbf16>
    %c0_4 = arith.constant 0 : index
    %c4 = arith.constant 4 : index
    %5 = vector.load %arg6[%c0_4, %c4] : memref<28x12xbf16, #tpu.memory_space<vmem>>, vector<14x4xbf16>
    tpu.vector_store %arg6[%c0_4, %c4], %4 {strides = array<i32>} : memref<28x12xbf16, #tpu.memory_space<vmem>>, vector<14x4xbf16>,
    %6 = vector.extract_strided_slice %1 {offsets = [2, 0], sizes = [14, 4], strides = [1, 1]} : vector<16x4xbf16> to vector<14x4xbf16>
    %c0_5 = arith.constant 0 : index
    %c8 = arith.constant 8 : index
    %7 = vector.load %arg6[%c0_5, %c8] : memref<28x12xbf16, #tpu.memory_space<vmem>>, vector<14x4xbf16>
    tpu.vector_store %arg6[%c0_5, %c8], %6 {strides = array<i32>} : memref<28x12xbf16, #tpu.memory_space<vmem>>, vector<14x4xbf16>,
    %c1 = arith.constant 1 : index
    %c0_6 = arith.constant 0 : index
    %c0_7 = arith.constant 0 : index
    %8 = vector.load %arg1[%c1, %c0_6, %c0_7] : memref<2x16x4xbf16, #tpu.memory_space<vmem>>, vector<1x16x4xbf16>
    %9 = vector.shape_cast %8 : vector<1x16x4xbf16> to vector<16x4xbf16>
    %10 = vector.extract_strided_slice %9 {offsets = [0, 0], sizes = [14, 4], strides = [1, 1]} : vector<16x4xbf16> to vector<14x4xbf16>
    %c14 = arith.constant 14 : index
    %c0_8 = arith.constant 0 : index
    %11 = vector.load %arg6[%c14, %c0_8] : memref<28x12xbf16, #tpu.memory_space<vmem>>, vector<14x4xbf16>
    tpu.vector_store %arg6[%c14, %c0_8], %10 {strides = array<i32>} : memref<28x12xbf16, #tpu.memory_space<vmem>>, vector<14x4xbf16>,
    %12 = vector.extract_strided_slice %9 {offsets = [1, 0], sizes = [14, 4], strides = [1, 1]} : vector<16x4xbf16> to vector<14x4xbf16>
    %c14_9 = arith.constant 14 : index
    %c4_10 = arith.constant 4 : index
    %13 = vector.load %arg6[%c14_9, %c4_10] : memref<28x12xbf16, #tpu.memory_space<vmem>>, vector<14x4xbf16>
    tpu.vector_store %arg6[%c14_9, %c4_10], %12 {strides = array<i32>} : memref<28x12xbf16, #tpu.memory_space<vmem>>, vector<14x4xbf16>,
    %14 = vector.extract_strided_slice %9 {offsets = [2, 0], sizes = [14, 4], strides = [1, 1]} : vector<16x4xbf16> to vector<14x4xbf16>
    %c14_11 = arith.constant 14 : index
    %c8_12 = arith.constant 8 : index
    %15 = vector.load %arg6[%c14_11, %c8_12] : memref<28x12xbf16, #tpu.memory_space<vmem>>, vector<14x4xbf16>
    tpu.vector_store %arg6[%c14_11, %c8_12], %14 {strides = array<i32>} : memref<28x12xbf16, #tpu.memory_space<vmem>>, vector<14x4xbf16>,
    %c0_13 = arith.constant 0 : index
    %c0_14 = arith.constant 0 : index
    %16 = vector.load %arg6[%c0_13, %c0_14] : memref<28x12xbf16, #tpu.memory_space<vmem>>, vector<28x12xbf16>
    %c0_15 = arith.constant 0 : index
    %c0_16 = arith.constant 0 : index
    %17 = vector.load %arg2[%c0_15, %c0_16] : memref<12x8xbf16, #tpu.memory_space<vmem>>, vector<12x8xbf16>
    %cst = arith.constant dense<0.000000e+00> : vector<28x8xf32>
    %18 = tpu.matmul %16, %17, %cst {dimension_numbers = #tpu.dot_dimension_numbers<[1], [0], [0], [1], [0, 0, 1, 1], [], []>} : vector<28x12xbf16>, vector<12x8xbf16>, vector<28x8xf32> -> vector<28x8xf32>
    %c0_17 = arith.constant 0 : index
    %c0_18 = arith.constant 0 : index
    %19 = vector.load %arg3[%c0_17, %c0_18] : memref<1x8xf32, #tpu.memory_space<vmem>>, vector<1x8xf32>
    %20 = vector.broadcast %19 : vector<1x8xf32> to vector<28x8xf32>
    %21 = arith.mulf %18, %20 : vector<28x8xf32>
    %c0_19 = arith.constant 0 : index
    %c0_20 = arith.constant 0 : index
    %22 = vector.load %arg4[%c0_19, %c0_20] : memref<1x8xf32, #tpu.memory_space<vmem>>, vector<1x8xf32>
    %23 = vector.broadcast %22 : vector<1x8xf32> to vector<28x8xf32>
    %24 = arith.addf %21, %23 : vector<28x8xf32>
    %cst_21 = arith.constant 0.000000e+00 : f32
    %25 = vector.broadcast %cst_21 : f32 to vector<28x8xf32>
    %26 = arith.maximumf %24, %25 : vector<28x8xf32>
    %c0_22 = arith.constant 0 : index
    %c0_23 = arith.constant 0 : index
    %27 = vector.load %arg7[%c0_22, %c0_23] : memref<28x8xf32, #tpu.memory_space<vmem>>, vector<28x8xf32>
    tpu.vector_store %arg7[%c0_22, %c0_23], %26 {strides = array<i32>} : memref<28x8xf32, #tpu.memory_space<vmem>>, vector<28x8xf32>,
    %c0_24 = arith.constant 0 : index
    %c0_25 = arith.constant 0 : index
    %28 = tpu.strided_load %arg7[%c0_24, %c0_25] {strides = array<i32: 2, 1>} : memref<28x8xf32, #tpu.memory_space<vmem>>, vector<7x8xf32>
    %c1_26 = arith.constant 1 : index
    %c0_27 = arith.constant 0 : index
    %29 = tpu.strided_load %arg7[%c1_26, %c0_27] {strides = array<i32: 2, 1>} : memref<28x8xf32, #tpu.memory_space<vmem>>, vector<7x8xf32>
    %30 = arith.maximumf %28, %29 : vector<7x8xf32>
    %c0_28 = arith.constant 0 : index
    %c0_29 = arith.constant 0 : index
    %c0_30 = arith.constant 0 : index
    %31 = vector.load %arg5[%c0_28, %c0_29, %c0_30] : memref<2x7x8xf32, #tpu.memory_space<vmem>>, vector<1x7x8xf32>
    %32 = vector.shape_cast %31 : vector<1x7x8xf32> to vector<7x8xf32>
    %33 = vector.shape_cast %30 : vector<7x8xf32> to vector<1x7x8xf32>
    tpu.vector_store %arg5[%c0_28, %c0_29, %c0_30], %33 {strides = array<i32>} : memref<2x7x8xf32, #tpu.memory_space<vmem>>, vector<1x7x8xf32>,
    %c14_31 = arith.constant 14 : index
    %c0_32 = arith.constant 0 : index
    %34 = tpu.strided_load %arg7[%c14_31, %c0_32] {strides = array<i32: 2, 1>} : memref<28x8xf32, #tpu.memory_space<vmem>>, vector<7x8xf32>
    %c15 = arith.constant 15 : index
    %c0_33 = arith.constant 0 : index
    %35 = tpu.strided_load %arg7[%c15, %c0_33] {strides = array<i32: 2, 1>} : memref<28x8xf32, #tpu.memory_space<vmem>>, vector<7x8xf32>
    %36 = arith.maximumf %34, %35 : vector<7x8xf32>
    %c1_34 = arith.constant 1 : index
    %c0_35 = arith.constant 0 : index
    %c0_36 = arith.constant 0 : index
    %37 = vector.load %arg5[%c1_34, %c0_35, %c0_36] : memref<2x7x8xf32, #tpu.memory_space<vmem>>, vector<1x7x8xf32>
    %38 = vector.shape_cast %37 : vector<1x7x8xf32> to vector<7x8xf32>
    %39 = vector.shape_cast %36 : vector<7x8xf32> to vector<1x7x8xf32>
    tpu.vector_store %arg5[%c1_34, %c0_35, %c0_36], %39 {strides = array<i32>} : memref<2x7x8xf32, #tpu.memory_space<vmem>>, vector<1x7x8xf32>,
    return
  }
  func.func @transform_0(%arg0: i32) -> (i32, i32, i32) {
    %c0_i32 = arith.constant 0 : i32
    %c0_i32_0 = arith.constant 0 : i32
    %c0_i32_1 = arith.constant 0 : i32
    return %arg0, %c0_i32, %c0_i32_0 : i32, i32, i32
  }
  func.func @transform_1(%arg0: i32) -> (i32, i32) {
    %c0_i32 = arith.constant 0 : i32
    %c0_i32_0 = arith.constant 0 : i32
    %c0_i32_1 = arith.constant 0 : i32
    return %c0_i32, %c0_i32_0 : i32, i32
  }
  func.func @transform_2(%arg0: i32) -> (i32, i32) {
    %c0_i32 = arith.constant 0 : i32
    %c0_i32_0 = arith.constant 0 : i32
    %c0_i32_1 = arith.constant 0 : i32
    return %c0_i32, %c0_i32_0 : i32, i32
  }
  func.func @transform_3(%arg0: i32) -> (i32, i32) {
    %c0_i32 = arith.constant 0 : i32
    %c0_i32_0 = arith.constant 0 : i32
    %c0_i32_1 = arith.constant 0 : i32
    return %c0_i32, %c0_i32_0 : i32, i32
  }
  func.func @transform_4(%arg0: i32) -> (i32, i32, i32) {
    %c0_i32 = arith.constant 0 : i32
    %c0_i32_0 = arith.constant 0 : i32
    %c0_i32_1 = arith.constant 0 : i32
    return %arg0, %c0_i32, %c0_i32_0 : i32, i32, i32
  }
}

</mosaic_0001>

<llo_original>
// kernel: tpu_custom_call.1
$region0: #{tpu_custom_call.1}
  #allocation0 [shape = 'u32[]', space=smem, size = 0x4, offset = 0x4, fixed_abs, tag = 'smem constant byte address 0x4 - core index']
  #allocation1 [shape = 'u32[144,128]{1,0:T(1,128)}', space=vmem, size = 0x12000, scoped, tag = 'internal scratch']
  #allocation2 [shape = 'bf16[28,12]{1,0:T(8,128)(2,1)}', space=vmem, size = 0x2000, scoped, tag = 'scratch operand']
  #allocation3 [shape = 'f32[28,8]{1,0:T(8,128)}', space=vmem, size = 0x4000, scoped, tag = 'scratch operand']
  %s0 = inlined_call_operand.vmem [shape: bf16[4,16,4], index: 0, kind: input, shape index: {}]
  %s1 = inlined_call_operand.vmem [shape: bf16[12,8], index: 1, kind: input, shape index: {}]
  %s2 = inlined_call_operand.vmem [shape: f32[1,8], index: 2, kind: input, shape index: {}]
  %s3 = inlined_call_operand.vmem [shape: f32[1,8], index: 3, kind: input, shape index: {}]
  %s4 = inlined_call_operand.vmem [shape: f32[4,7,8], index: 4, kind: output, shape index: {}]
  %s5 = sld [smem:[#allocation0]]
  $region49: #{tpu_custom_call.1} parent=0
    _
  %s7 = ssub.s32 1, %s5
  %s8 = scalar_select 0, %s7, %s5
  loop: start=0, step=1, limit=4
  $region2: #{tpu_custom_call.1} parent=0 // loop_pre_header
    _
  $region3: #{tpu_custom_call.1} parent=0 // loop_header
    %s10 = sphi 0, %s14
    %p11 = scmp.ge.s32.totalorder %s10, 4
    %s20 = sphi 0, %s22
    %s23 = sphi 0, %s20
    %s24 = sphi 0, %s23
    %s40 = sphi 0, %s24
    %s44 = sphi 0, %s44
    %s46 = sphi 0, %s44
    %s47 = sphi 0, %s46
    %s61 = sphi 0, %s47
    %s65 = sphi 0, %s65
    %s67 = sphi 0, %s65
    %s68 = sphi 0, %s67
    %s82 = sphi 0, %s68
    %s86 = sphi 0, %s86
    %s88 = sphi 0, %s86
    %s89 = sphi 0, %s88
    %s103 = sphi 0, %s89
    %s109 = sphi 0, %s111
    %s112 = sphi 0, %s109
    %s113 = sphi 0, %s112
    %s129 = sphi 0, %s113
  $region4: #{tpu_custom_call.1} parent=0 // loop_header_branch
    %13 = sbr.rel (%p11) target = $region8
  $region5: #{tpu_custom_call.1} parent=0 // loop_body
    %s15 = ssub.s32 %s10, 1
    %s16 = ssub.s32 %s10, 2
    %s17 = sadd.s32 %s10, 1
    %s18 = ssub.s32 %s10, %s17
    %p19 = scmp.eq.s32.totalorder %s18, 0
    %s21 = sadd.s32 %s20, 1
    %s22 = scalar_select %p19, %s20, %s21
    %p25 = pneg %p19
    %p26 = scmp.eq.s32.totalorder %s10, 1
    %p27 = por %p25, %p26
    %p28 = scmp.ne.s32.totalorder %s20, %s23
    %p29 = scmp.eq.s32.totalorder %s10, 0
    %p30 = por %p28, %p29
    %p31 = scmp.ne.s32.totalorder %s20, %s23
    %p32 = scmp.eq.s32.totalorder %s15, 1
    %p33 = por %p31, %p32
    %p34 = scmp.ne.s32.totalorder %s23, %s24
    %p35 = scmp.eq.s32.totalorder %s15, 0
    %p36 = por %p34, %p35
    %p37 = scmp.ne.s32.totalorder %s23, %s24
    %p38 = scmp.eq.s32.totalorder %s16, 1
    %p39 = por %p37, %p38
    %p41 = scmp.ne.s32.totalorder %s24, %s40
    %p42 = scmp.eq.s32.totalorder %s16, 0
    %p43 = por %p41, %p42
    %s45 = sadd.s32 %s44, 1
    %p48 = scmp.eq.s32.totalorder %s10, 1
    %p49 = scmp.ne.s32.totalorder %s44, %s46
    %p50 = scmp.eq.s32.totalorder %s10, 0
    %p51 = por %p49, %p50
    %p52 = scmp.ne.s32.totalorder %s44, %s46
    %p53 = scmp.eq.s32.totalorder %s15, 1
    %p54 = por %p52, %p53
    %p55 = scmp.ne.s32.totalorder %s46, %s47
    %p56 = scmp.eq.s32.totalorder %s15, 0
    %p57 = por %p55, %p56
    %p58 = scmp.ne.s32.totalorder %s46, %s47
    %p59 = scmp.eq.s32.totalorder %s16, 1
    %p60 = por %p58, %p59
    %p62 = scmp.ne.s32.totalorder %s47, %s61
    %p63 = scmp.eq.s32.totalorder %s16, 0
    %p64 = por %p62, %p63
    %s66 = sadd.s32 %s65, 1
    %p69 = scmp.eq.s32.totalorder %s10, 1
    %p70 = scmp.ne.s32.totalorder %s65, %s67
    %p71 = scmp.eq.s32.totalorder %s10, 0
    %p72 = por %p70, %p71
    %p73 = scmp.ne.s32.totalorder %s65, %s67
    %p74 = scmp.eq.s32.totalorder %s15, 1
    %p75 = por %p73, %p74
    %p76 = scmp.ne.s32.totalorder %s67, %s68
    %p77 = scmp.eq.s32.totalorder %s15, 0
    %p78 = por %p76, %p77
    %p79 = scmp.ne.s32.totalorder %s67, %s68
    %p80 = scmp.eq.s32.totalorder %s16, 1
    %p81 = por %p79, %p80
    %p83 = scmp.ne.s32.totalorder %s68, %s82
    %p84 = scmp.eq.s32.totalorder %s16, 0
    %p85 = por %p83, %p84
    %s87 = sadd.s32 %s86, 1
    %p90 = scmp.eq.s32.totalorder %s10, 1
    %p91 = scmp.ne.s32.totalorder %s86, %s88
    %p92 = scmp.eq.s32.totalorder %s10, 0
    %p93 = por %p91, %p92
    %p94 = scmp.ne.s32.totalorder %s86, %s88
    %p95 = scmp.eq.s32.totalorder %s15, 1
    %p96 = por %p94, %p95
    %p97 = scmp.ne.s32.totalorder %s88, %s89
    %p98 = scmp.eq.s32.totalorder %s15, 0
    %p99 = por %p97, %p98
    %p100 = scmp.ne.s32.totalorder %s88, %s89
    %p101 = scmp.eq.s32.totalorder %s16, 1
    %p102 = por %p100, %p101
    %p104 = scmp.ne.s32.totalorder %s89, %s103
    %p105 = scmp.eq.s32.totalorder %s16, 0
    %p106 = por %p104, %p105
    %s107 = ssub.s32 %s10, %s17
    %p108 = scmp.eq.s32.totalorder %s107, 0
    %s110 = sadd.s32 %s109, 1
    %s111 = scalar_select %p108, %s109, %s110
    %p114 = pneg %p108
    %p115 = scmp.eq.s32.totalorder %s10, 1
    %p116 = por %p114, %p115
    %p117 = scmp.ne.s32.totalorder %s109, %s112
    %p118 = scmp.eq.s32.totalorder %s10, 0
    %p119 = por %p117, %p118
    %p120 = scmp.ne.s32.totalorder %s109, %s112
    %p121 = scmp.eq.s32.totalorder %s15, 1
    %p122 = por %p120, %p121
    %p123 = scmp.ne.s32.totalorder %s112, %s113
    %p124 = scmp.eq.s32.totalorder %s15, 0
    %p125 = por %p123, %p124
    %p126 = scmp.ne.s32.totalorder %s112, %s113
    %p127 = scmp.eq.s32.totalorder %s16, 1
    %p128 = por %p126, %p127
    %p130 = scmp.ne.s32.totalorder %s113, %s129
    %p131 = scmp.eq.s32.totalorder %s16, 0
    %p132 = por %p130, %p131
    %p133 = scmp.le.s32.totalorder 1, %s10
    %p134 = scmp.lt.s32.totalorder %s10, 3
    %p135 = pnand %p133, %p134
    %p136 = pneg %p135
    // Predicated region
    $region9: #{tpu_custom_call.1} parent=5 // pred_check
      _
    $region10: #{tpu_custom_call.1} parent=5 // pred_check_branch
      %138 = sbr.rel (%p135) target = $region12
    $region11: #{tpu_custom_call.1} parent=5 // pred_region
      %s139 = ssub.s32 %s10, 1
      // Predicated region
      $region13: #{tpu_custom_call.1} parent=11 // pred_check
        %p140 = pneg %p57
      $region14: #{tpu_custom_call.1} parent=11 // pred_check_branch
        %142 = sbr.rel (%p140) target = $region16
      $region15: #{tpu_custom_call.1} parent=11 // pred_region
        _
      $region16: #{tpu_custom_call.1} parent=11 // pred_fallthru
        _
      // Predicated region
      $region17: #{tpu_custom_call.1} parent=11 // pred_check
        %p143 = pneg %p78
      $region18: #{tpu_custom_call.1} parent=11 // pred_check_branch
        %145 = sbr.rel (%p143) target = $region20
      $region19: #{tpu_custom_call.1} parent=11 // pred_region
        _
      $region20: #{tpu_custom_call.1} parent=11 // pred_fallthru
        _
      // Predicated region
      $region21: #{tpu_custom_call.1} parent=11 // pred_check
        %p146 = pneg %p99
      $region22: #{tpu_custom_call.1} parent=11 // pred_check_branch
        %148 = sbr.rel (%p146) target = $region24
      $region23: #{tpu_custom_call.1} parent=11 // pred_region
        _
      $region24: #{tpu_custom_call.1} parent=11 // pred_fallthru
        _
    $region12: #{tpu_custom_call.1} parent=5 // pred_fallthru
      _
    %p149 = scmp.lt.s32.totalorder %s10, 2
    // Predicated region
    $region25: #{tpu_custom_call.1} parent=5 // pred_check
      %p150 = pneg %p149
    $region26: #{tpu_custom_call.1} parent=5 // pred_check_branch
      %152 = sbr.rel (%p150) target = $region28
    $region27: #{tpu_custom_call.1} parent=5 // pred_region
      // Predicated region
      $region29: #{tpu_custom_call.1} parent=27 // pred_check
        %p153 = pneg %p30
      $region30: #{tpu_custom_call.1} parent=27 // pred_check_branch
        %155 = sbr.rel (%p153) target = $region32
      $region31: #{tpu_custom_call.1} parent=27 // pred_region
        %s156 = smul.u32 2, %s10
        %p157 = scmp.lt.s32.totalorder %s156, 3
        %s158 = scalar_select %p157, %s156, 3
        %s159 = smul.addr %s158, 2
        %s160 = smul.addr %s159, 4
        %s161 = scalar_lea.vmem %s0, %s160
        %s162 = smul.u32 2, %s10
      $region32: #{tpu_custom_call.1} parent=27 // pred_fallthru
        _
    $region28: #{tpu_custom_call.1} parent=5 // pred_fallthru
      _
    %p163 = scmp.le.s32.totalorder 1, %s10
    %p164 = scmp.lt.s32.totalorder %s10, 3
    %p165 = pnand %p163, %p164
    %p166 = pneg %p165
    // Predicated region
    $region33: #{tpu_custom_call.1} parent=5 // pred_check
      _
    $region34: #{tpu_custom_call.1} parent=5 // pred_check_branch
      %168 = sbr.rel (%p165) target = $region36
    $region35: #{tpu_custom_call.1} parent=5 // pred_region
      %s169 = ssub.s32 %s10, 1
      %s170 = smul.u32 2, %s15
      %p171 = scmp.lt.s32.totalorder %s170, 3
      %s172 = scalar_select %p171, %s170, 3
      %s173 = smul.addr %s172, 2
      %s174 = smul.addr %s173, 4
      %s175 = scalar_lea.vmem %s0, %s174
      %p176 = pneg %p36
      %p177 = pneg %p33
      %p178 = pneg %p57
      %p179 = pneg %p54
      %p180 = pneg %p78
      %p181 = pneg %p75
      %p182 = pneg %p99
      %p183 = pneg %p96
      %p184 = pneg %p125
      %p185 = pneg %p122
      %s186 = smul.u32 2, %s15
      %p187 = scmp.lt.s32.totalorder %s186, 3
      %s188 = scalar_select %p187, %s186, 3
      %s189 = smul.addr %s188, 8
      %s190 = scalar_lea.vmem %s4, %s189
      %s191 = smul.u32 2, %s15
      %p192 = scmp.lt.s32.totalorder %s191, 3
      %s193 = scalar_select %p192, %s191, 3
      %s194 = smul.addr %s193, 2
      %s195 = smul.addr %s194, 4
      %s196 = scalar_lea.vmem %s0, %s195
      %s197 = smul.u32 2, %s15
      %s198 = smul.u32 2, %s15
      %p199 = scmp.lt.s32.totalorder %s198, 3
      %s200 = scalar_select %p199, %s198, 3
      %s201 = smul.addr %s200, 8
      %s202 = scalar_lea.vmem %s4, %s201
      %s203 = smul.u32 2, %s15
      %v205 = vld [vmem:[%s196] sm:$0xf]
      %v206 = vld [vmem:[%s196 + $0x4] sm:$0xf]
      %vm207 = vcmask 27648
      %208 = vst.msk [vmem:[#allocation2] sm:$0xf] %vm207, %v205
      %vm209 = vcmask 26624
      %210 = vst.msk [vmem:[#allocation2 + $0x4] sm:$0x7] %vm209, %v206
      %vm211 = vsmask.f32 3328
      %vm212 = vsmask.f32 7440
      %vm213 = vmor %vm211, %vm212
      %v215 = vshrl.u32 %v205, 16
      %v217 = vrot.slane %v215, 4
      %v218 = vshll.u32 %v205, 16
      %v220 = vrot.slane %v218, 5
      %v221 = vor.u32 %v217, %v220
      %v222 = vrot.slane %v221, 4
      %v224 = vshll.u32 %v206, 16
      %v226 = vrot.slane %v224, 5
      %v227 = vsel %vm213, %v222, %v226
      %v228 = vshrl.u32 %v206, 16
      %v230 = vrot.slane %v228, 4
      %v231 = vor.u32 %v230, %v226
      %v232 = vrot.slane %v231, 4
      %233 = vrot.lane.b32.xlu0 %v227, 4
      %v234 = vpop.permute.xlu0 %233
      %235 = vrot.lane.b32.xlu0 %v232, 4
      %v236 = vpop.permute.xlu0 %235
      %vm239 = vcmask 60448
      %240 = vst.msk [vmem:[#allocation2] sm:$0xf] %vm239, %v234
      %vm241 = vcmask 59424
      %242 = vst.msk [vmem:[#allocation2 + $0x4] sm:$0x7] %vm241, %v236
      %vm245 = vcmask 1042432
      %vm246 = vcmask 1046532
      %vm247 = vmor %vm245, %vm246
      %v248 = vrot.slane %v205, 5
      %v249 = vrot.slane %v248, 4
      %v250 = vrot.slane %v206, 5
      %v251 = vsel %vm247, %v249, %v250
      %v252 = vrot.slane %v250, 4
      %253 = vrot.lane.b32.xlu0 %v251, 8
      %v254 = vpop.permute.xlu0 %253
      %255 = vrot.lane.b32.xlu0 %v252, 8
      %v256 = vpop.permute.xlu0 %255
      %vm259 = vcmask 93248
      %260 = vst.msk [vmem:[#allocation2] sm:$0xf] %vm259, %v254
      %vm261 = vcmask 92224
      %262 = vst.msk [vmem:[#allocation2 + $0x4] sm:$0x7] %vm261, %v256
      %s263 = scalar_lea.vmem %s196, 8
      %v264 = vld [vmem:[%s263] sm:$0xf]
      %v265 = vld [vmem:[%s263 + $0x4] sm:$0xf]
      %v268 = vrot.slane %v264, 5
      %v269 = vrot.slane %v268, 4
      %v270 = vrot.slane %v265, 5
      %v271 = vsel %vm247, %v269, %v270
      %v272 = vrot.slane %v270, 4
      %vm276 = vcmask 27651
      %277 = vst.msk [vmem:[#allocation2 + $0x4] sm:$0x8] %vm276, %v268
      %278 = vst.msk [vmem:[#allocation2 + $0x8] sm:$0xf] %vm207, %v271
      %vm279 = vcmask 25600
      %280 = vst.msk [vmem:[#allocation2 + $0xc] sm:$0x3] %vm279, %v272
      %vm281 = vsmask.f32 2304
      %vm282 = vsmask.f32 6416
      %vm283 = vmor %vm281, %vm282
      %v285 = vshrl.u32 %v264, 16
      %v287 = vrot.slane %v285, 5
      %v288 = vshll.u32 %v264, 16
      %v290 = vrot.slane %v288, 6
      %v291 = vor.u32 %v287, %v290
      %v292 = vrot.slane %v291, 4
      %v294 = vshrl.u32 %v265, 16
      %v296 = vrot.slane %v294, 5
      %v297 = vshll.u32 %v265, 16
      %v299 = vrot.slane %v297, 6
      %v300 = vor.u32 %v296, %v299
      %v301 = vsel %vm283, %v292, %v300
      %v302 = vrot.slane %v300, 4
      %303 = vrot.lane.b32.xlu0 %v291, 4
      %v304 = vpop.permute.xlu0 %303
      %305 = vrot.lane.b32.xlu0 %v301, 4
      %v306 = vpop.permute.xlu0 %305
      %307 = vrot.lane.b32.xlu0 %v302, 4
      %v308 = vpop.permute.xlu0 %307
      %vm312 = vcmask 60451
      %313 = vst.msk [vmem:[#allocation2 + $0x4] sm:$0x8] %vm312, %v304
      %314 = vst.msk [vmem:[#allocation2 + $0x8] sm:$0xf] %vm239, %v306
      %vm315 = vcmask 58400
      %316 = vst.msk [vmem:[#allocation2 + $0xc] sm:$0x3] %vm315, %v308
      %vm317 = vcmask 1041408
      %vm318 = vcmask 1045508
      %vm319 = vmor %vm317, %vm318
      %v320 = vrot.slane %v264, 6
      %v321 = vrot.slane %v320, 4
      %v322 = vrot.slane %v265, 6
      %v323 = vsel %vm319, %v321, %v322
      %v324 = vrot.slane %v322, 4
      %325 = vrot.lane.b32.xlu0 %v320, 8
      %v326 = vpop.permute.xlu0 %325
      %327 = vrot.lane.b32.xlu0 %v323, 8
      %v328 = vpop.permute.xlu0 %327
      %329 = vrot.lane.b32.xlu0 %v324, 8
      %v330 = vpop.permute.xlu0 %329
      %vm334 = vcmask 93251
      %335 = vst.msk [vmem:[#allocation2 + $0x4] sm:$0x8] %vm334, %v326
      %336 = vst.msk [vmem:[#allocation2 + $0x8] sm:$0xf] %vm259, %v328
      %vm337 = vcmask 91200
      %338 = vst.msk [vmem:[#allocation2 + $0xc] sm:$0x3] %vm337, %v330
      %v339 = vld [vmem:[#allocation2] sm:$0xf]
      %v340 = vld [vmem:[#allocation2 + $0x4] sm:$0xf]
      %v341 = vld [vmem:[#allocation2 + $0x8] sm:$0xf]
      %v342 = vld [vmem:[#allocation2 + $0xc] sm:$0x3]
      %v343 = vld [vmem:[%s1] sm:$0xf]
      %v344 = vld [vmem:[%s1 + $0x4] sm:$0x3]
      %v349 = vunpack.c.l.b16 %v339
      %v350 = vunpack.c.l.b16 %v340
      %v351 = vunpack.c.l.b16 %v341
      %v352 = vunpack.c.l.b16 %v342
      %v353 = vpack.c.b16 %v350, %v349
      %v354 = vpack.c.b16 %v352, %v351
      %v357 = vunpack.c.l.b16 %v343
      %v358 = vunpack.c.l.b16 %v344
      %v359 = vpack.c.b16 %v358, %v357
      %vm360 = vcmask 97280
      %v362 = vsel %vm360, %v353, 0
      %v365 = vsel %vm360, %v354, 0
      %vm367 = vcmask 1045504
      %v369 = vsel %vm367, %v359, 0
      %371 = vmatprep.subr.bf16.mxu0 0
      %372 = vmatpush1.bf16.msra.mxu0 %v369
      %373 = vmatprep.subr.bf16.mxu0 0
      %374 = vmatpush1.bf16.msra.mxu0 0
      %375 = vmatprep.subr.bf16.mxu0 0
      %376 = vmatpush1.bf16.msra.mxu0 0
      %377 = vmatprep.subr.bf16.mxu0 0
      %378 = vmatpush1.bf16.msra.mxu0 0
      %379 = vmatprep.subr.bf16.mxu0 0
      %380 = vmatpush1.bf16.msra.mxu0 0
      %381 = vmatprep.subr.bf16.mxu0 0
      %382 = vmatpush1.bf16.msra.mxu0 0
      %383 = vmatprep.subr.bf16.mxu0 0
      %384 = vmatpush1.bf16.msra.mxu0 0
      %385 = vmatprep.subr.bf16.mxu0 0
      %386 = vmatpush1.bf16.msra.mxu0 0
      %387 = vmatprep.subr.bf16.mxu0 0
      %388 = vmatpush1.bf16.msra.mxu0 0
      %389 = vmatprep.subr.bf16.mxu0 0
      %390 = vmatpush1.bf16.msra.mxu0 0
      %391 = vmatprep.subr.bf16.mxu0 0
      %392 = vmatpush1.bf16.msra.mxu0 0
      %393 = vmatprep.subr.bf16.mxu0 0
      %394 = vmatpush1.bf16.msra.mxu0 0
      %395 = vmatprep.subr.bf16.mxu0 0
      %396 = vmatpush1.bf16.msra.mxu0 0
      %397 = vmatprep.subr.bf16.mxu0 0
      %398 = vmatpush1.bf16.msra.mxu0 0
      %399 = vmatprep.subr.bf16.mxu0 0
      %400 = vmatpush1.bf16.msra.mxu0 0
      %401 = vmatprep.subr.bf16.mxu0 0
      %402 = vmatpush1.bf16.msra.mxu0 0
      %403 = vmatprep.mubr.bf16.mxu0 0
      %404 = vmatmul.mubr.bf16.gmra.mrb[0].mxu0 %v362
      %v405 = vpop.f32.mrb[0].mxu0
      %v406 = vadd.f32 0.0, %v405
      %v407 = vpop.f32.mrb[0].mxu0
      %v408 = vpop.f32.mrb[0].mxu0
      %v409 = vadd.f32 0.0, %v408
      %v410 = vpop.f32.mrb[0].mxu0
      %411 = vmatprep.mubr.bf16.mxu0 0
      %412 = vmatmul.mubr.bf16.gmra.mrb[0].mxu0 %v365
      %v413 = vpop.f32.mrb[0].mxu0
      %v414 = vadd.f32 0.0, %v413
      %v415 = vpop.f32.mrb[0].mxu0
      %v416 = vpop.f32.mrb[0].mxu0
      %v417 = vadd.f32 0.0, %v416
      %v418 = vpop.f32.mrb[0].mxu0
      %419 = vdwg.mxu0
      %v420 = vld [vmem:[%s2] sm:$0x1]
      %v422 = vlaneseq
      %v423 = vshrl.u32 %v422, 7
      %v424 = vsub.s32 0, %v423
      %v425 = vrot.slane %v420, %v424
      %v427 = vmul.f32 %v406, %v425
      %v428 = vmul.f32 %v409, %v425
      %v429 = vmul.f32 %v414, %v425
      %v430 = vmul.f32 %v417, %v425
      %v431 = vld [vmem:[%s3] sm:$0x1]
      %v433 = vlaneseq
      %v434 = vshrl.u32 %v433, 7
      %v435 = vsub.s32 0, %v434
      %v436 = vrot.slane %v431, %v435
      %v438 = vadd.f32 %v427, %v436
      %v439 = vadd.f32 %v428, %v436
      %v440 = vadd.f32 %v429, %v436
      %v441 = vadd.f32 %v430, %v436
      %v442 = vmax.f32 %v438, 0.0
      %v443 = vmax.f32 %v439, 0.0
      %v444 = vmax.f32 %v440, 0.0
      %v445 = vmax.f32 %v441, 0.0
      %vm446 = vcmask 64512
      %447 = vst.msk [vmem:[#allocation3] sm:$0xff] %vm446, %v442
      %448 = vst.msk [vmem:[#allocation3 + $0x8] sm:$0xff] %vm446, %v443
      %449 = vst.msk [vmem:[#allocation3 + $0x10] sm:$0xff] %vm446, %v444
      %vm450 = vcmask 60416
      %451 = vst.msk [vmem:[#allocation3 + $0x18] sm:$0xf] %vm450, %v445
      %v452 = vld [vmem:[#allocation3] ss:$2 sm:$0x7f]
      %s453 = scalar_lea.vmem [#allocation3], 1
      %v454 = vld [vmem:[%s453] ss:$2 sm:$0x7f]
      %v455 = vmax.f32 %v452, %v454
      %vm456 = vcmask 63488
      %457 = vst.msk [vmem:[%s202] sm:$0x7f] %vm456, %v455
      %s458 = scalar_lea.vmem [#allocation3], 14
      %v459 = vld [vmem:[%s458] ss:$2 sm:$0x7f]
      %s460 = scalar_lea.vmem [#allocation3], 15
      %v461 = vld [vmem:[%s460] ss:$2 sm:$0x7f]
      %v462 = vmax.f32 %v459, %v461
      %s463 = scalar_lea.vmem %s202, 8
      %464 = vst.msk [vmem:[%s463] sm:$0x7f] %vm456, %v462
      %s465 = smul.u32 2, %s15
      %p466 = scmp.lt.s32.totalorder %s465, 3
      %s467 = scalar_select %p466, %s465, 3
      %s468 = smul.addr %s467, 8
      %s469 = scalar_lea.vmem %s4, %s468
      // Predicated region
      $region37: #{tpu_custom_call.1} parent=35 // pred_check
        %p470 = pneg %p122
      $region38: #{tpu_custom_call.1} parent=35 // pred_check_branch
        %472 = sbr.rel (%p470) target = $region40
      $region39: #{tpu_custom_call.1} parent=35 // pred_region
        %s473 = smul.u32 2, %s15
      $region40: #{tpu_custom_call.1} parent=35 // pred_fallthru
        _
    $region36: #{tpu_custom_call.1} parent=5 // pred_fallthru
      _
    %p474 = scmp.le.s32.totalorder 2, %s10
    // Predicated region
    $region41: #{tpu_custom_call.1} parent=5 // pred_check
      %p475 = pneg %p474
    $region42: #{tpu_custom_call.1} parent=5 // pred_check_branch
      %477 = sbr.rel (%p475) target = $region44
    $region43: #{tpu_custom_call.1} parent=5 // pred_region
      %s478 = ssub.s32 %s10, 2
      // Predicated region
      $region45: #{tpu_custom_call.1} parent=43 // pred_check
        %p479 = pneg %p128
      $region46: #{tpu_custom_call.1} parent=43 // pred_check_branch
        %481 = sbr.rel (%p479) target = $region48
      $region47: #{tpu_custom_call.1} parent=43 // pred_region
        %s482 = smul.u32 2, %s16
        %p483 = scmp.lt.s32.totalorder %s482, 3
        %s484 = scalar_select %p483, %s482, 3
        %s485 = smul.addr %s484, 8
        %s486 = scalar_lea.vmem %s4, %s485
      $region48: #{tpu_custom_call.1} parent=43 // pred_fallthru
        _
    $region44: #{tpu_custom_call.1} parent=5 // pred_fallthru
      _
  $region6: #{tpu_custom_call.1} parent=0 // loop_footer
    %s14 = sadd.s32 1, %s10
  $region7: #{tpu_custom_call.1} parent=0 // loop_footer_branch
    %9 = sbr.rel target = $region3
  $region8: #{tpu_custom_call.1} parent=0 // loop_exit
    _

</llo_original>
